<compile_context>
chip_gen: v7x
topology: tpu7x:2x2x1
jax: 0.10.0
libtpu: 0.0.40
codegen_flags: <defaults>
</compile_context>

<pallas_src>
import functools

import jax
import jax.numpy as jnp
from jax.experimental import pallas as pl
from jax.experimental.pallas import tpu as pltpu

D_IN, D_H1, D_LAT = 52, 20, 10
# offsets of the packed bias column: [b1 | b2 | b3 | b4]
_B1 = (0, D_H1)                         # (0, 20)
_B2 = (_B1[1], _B1[1] + D_LAT)          # (20, 30)
_B3 = (_B2[1], _B2[1] + D_H1)           # (30, 50)
_B4 = (_B3[1], _B3[1] + D_IN)           # (50, 102)


def sae_kernel(x_ref, w1_ref, w2_ref, w3_ref, w4_ref, b_ref, o_ref, *,
               compute_dtype):
    """One grid step: all four layers on a (features, block_b) activation tile.

    x_ref : (D_IN, block_b)   batch on lanes, features on sublanes
    w*_ref: PyTorch (out, in) weights
    b_ref : (102, 1) packed biases (broadcast along the lane/batch dim)
    o_ref : (D_IN, block_b)   lane-dense output tile
    """
    x = x_ref[...].astype(compute_dtype)                       # (52, Bt)

    h1 = jnp.dot(w1_ref[...].astype(compute_dtype), x,
                 preferred_element_type=jnp.float32) + b_ref[_B1[0]:_B1[1], :]
    h1 = jnp.maximum(h1, 0.0)                                  # (20, Bt)

    h2 = jnp.dot(w2_ref[...].astype(compute_dtype), h1.astype(compute_dtype),
                 preferred_element_type=jnp.float32) + b_ref[_B2[0]:_B2[1], :]
    h2 = jnp.maximum(h2, 0.0)                                  # (10, Bt)

    h3 = jnp.dot(w3_ref[...].astype(compute_dtype), h2.astype(compute_dtype),
                 preferred_element_type=jnp.float32) + b_ref[_B3[0]:_B3[1], :]
    h3 = jnp.maximum(h3, 0.0)                                  # (20, Bt)

    z = jnp.dot(w4_ref[...].astype(compute_dtype), h3.astype(compute_dtype),
                preferred_element_type=jnp.float32) + b_ref[_B4[0]:_B4[1], :]
    o_ref[...] = jax.nn.sigmoid(z)                             # (52, Bt)


def sparse_autoencoder_forward(x, params, *, block_b=512,
                               compute_dtype=jnp.float32):
    """x: (B, 52) float32. params: PyTorch-layout weights (out,in) and biases (out,)."""
    B, d_in = x.shape
    assert d_in == D_IN

    # Batch is the lane dim -> tile must be a multiple of 128; clamp for tiny B.
    lane_rounded_b = 128 * pl.cdiv(B, 128)
    block_b = min(block_b, lane_rounded_b)
    block_b = max(128, (block_b // 128) * 128)

    n_blocks = pl.cdiv(B, block_b)
    b_pad = n_blocks * block_b

    w1 = params["w1"].astype(compute_dtype)   # (20, 52)
    w2 = params["w2"].astype(compute_dtype)   # (10, 20)
    w3 = params["w3"].astype(compute_dtype)   # (20, 10)
    w4 = params["w4"].astype(compute_dtype)   # (52, 20)
    # Pack the four biases into a single (102, 1) column (kept f32 for accuracy).
    b_packed = jnp.concatenate(
        [params[k].reshape(-1) for k in ("b1", "b2", "b3", "b4")]
    ).astype(jnp.float32).reshape(-1, 1)

    # Layout plumbing: batch on lanes, features on sublanes; zero-pad tail tile.
    x_t = x.T                                                   # (52, B)
    if b_pad != B:
        x_t = jnp.pad(x_t, ((0, 0), (0, b_pad - B)))

    def full_spec(arr):
        return pl.BlockSpec(arr.shape, lambda i: (0, 0))

    kernel = functools.partial(sae_kernel, compute_dtype=compute_dtype)

    out_t = pl.pallas_call(
        kernel,
        out_shape=jax.ShapeDtypeStruct((D_IN, b_pad), jnp.float32),
        grid_spec=pltpu.PrefetchScalarGridSpec(
            num_scalar_prefetch=0,
            grid=(n_blocks,),
            in_specs=[
                pl.BlockSpec((D_IN, block_b), lambda i: (0, i)),   # x tile
                full_spec(w1), full_spec(w2), full_spec(w3), full_spec(w4),
                full_spec(b_packed),
            ],
            out_specs=pl.BlockSpec((D_IN, block_b), lambda i: (0, i)),
        ),
        compiler_params=pltpu.CompilerParams(
            dimension_semantics=("parallel",)),
    )(x_t, w1, w2, w3, w4, b_packed)

    return out_t[:, :B].T                                       # (B, 52)


def init_params(key):
    """nn.Linear default init U(-1/sqrt(fan_in), 1/sqrt(fan_in)), PyTorch (out,in) layout."""
    dims = [(D_H1, D_IN), (D_LAT, D_H1), (D_H1, D_LAT), (D_IN, D_H1)]
    params = {}
    for idx, (fout, fin) in enumerate(dims, start=1):
        key, kw, kb = jax.random.split(key, 3)
        bound = 1.0 / (fin ** 0.5)
        params[f"w{idx}"] = jax.random.uniform(
            kw, (fout, fin), jnp.float32, minval=-bound, maxval=bound)
        params[f"b{idx}"] = jax.random.uniform(
            kb, (fout,), jnp.float32, minval=-bound, maxval=bound)
    return params


def reference_forward(x, p):
    h = jnp.maximum(x @ p["w1"].T + p["b1"], 0.0)
    h = jnp.maximum(h @ p["w2"].T + p["b2"], 0.0)
    h = jnp.maximum(h @ p["w3"].T + p["b3"], 0.0)
    return jax.nn.sigmoid(h @ p["w4"].T + p["b4"])


if __name__ == "__main__":
    key = jax.random.PRNGKey(0)
    key, kx = jax.random.split(key)
    params = init_params(key)

    # Small batch: exercises the clamp-to-128 / zero-padded-tail path.
    B = 8
    x = jax.random.normal(kx, (B, D_IN), jnp.float32)
    out = jax.block_until_ready(sparse_autoencoder_forward(x, params))
    ref = reference_forward(x, params)
    assert out.shape == (B, D_IN)
    assert jnp.allclose(out, ref, atol=1e-4, rtol=1e-4), "mismatch vs JAX reference (B=8)"

    # Ragged batch with a multi-step grid (3 tiles of 128, padded tail).
    B2 = 300
    x2 = jax.random.normal(jax.random.PRNGKey(1), (B2, D_IN), jnp.float32)
    out2 = jax.block_until_ready(
        sparse_autoencoder_forward(x2, params, block_b=128))
    ref2 = reference_forward(x2, params)
    assert out2.shape == (B2, D_IN)
    assert jnp.allclose(out2, ref2, atol=1e-4, rtol=1e-4), "mismatch vs JAX reference (B=300)"

    print("KERNEL_OK")
</pallas_src>

<mosaic_0001>
module attributes {stable_mosaic.version = 11 : i64} {
  func.func @sae_kernel(%arg0: i32, %arg1: memref<52x128xf32, #tpu.memory_space<vmem>>, %arg2: memref<20x52xf32, #tpu.memory_space<vmem>>, %arg3: memref<10x20xf32, #tpu.memory_space<vmem>>, %arg4: memref<20x10xf32, #tpu.memory_space<vmem>>, %arg5: memref<52x20xf32, #tpu.memory_space<vmem>>, %arg6: memref<102x1xf32, #tpu.memory_space<vmem>>, %arg7: memref<52x128xf32, #tpu.memory_space<vmem>>) attributes {dimension_semantics = [#tpu.dimension_semantics<parallel>], iteration_bounds = array<i64: 1>, scalar_prefetch = 0 : i64, scratch_operands = 0 : i64, tpu.core_type = #tpu.core_type<tc>, window_params = [{transform_indices = @transform_0, window_bounds = array<i64: 52, 128>}, {pipeline_mode = #tpu.pipeline_mode<synchronous>, transform_indices = @transform_1, window_bounds = array<i64: 20, 52>}, {pipeline_mode = #tpu.pipeline_mode<synchronous>, transform_indices = @transform_2, window_bounds = array<i64: 10, 20>}, {pipeline_mode = #tpu.pipeline_mode<synchronous>, transform_indices = @transform_3, window_bounds = array<i64: 20, 10>}, {pipeline_mode = #tpu.pipeline_mode<synchronous>, transform_indices = @transform_4, window_bounds = array<i64: 52, 20>}, {pipeline_mode = #tpu.pipeline_mode<synchronous>, transform_indices = @transform_5, window_bounds = array<i64: 102, 1>}, {transform_indices = @transform_6, window_bounds = array<i64: 52, 128>}]} {
    %c0 = arith.constant 0 : index
    %c0_0 = arith.constant 0 : index
    %0 = vector.load %arg1[%c0, %c0_0] : memref<52x128xf32, #tpu.memory_space<vmem>>, vector<52x128xf32>
    %c0_1 = arith.constant 0 : index
    %c0_2 = arith.constant 0 : index
    %1 = vector.load %arg2[%c0_1, %c0_2] : memref<20x52xf32, #tpu.memory_space<vmem>>, vector<20x52xf32>
    %cst = arith.constant dense<0.000000e+00> : vector<20x128xf32>
    %2 = tpu.matmul %1, %0, %cst {dimension_numbers = #tpu.dot_dimension_numbers<[1], [0], [0], [1], [0, 0, 1, 1], [], []>} : vector<20x52xf32>, vector<52x128xf32>, vector<20x128xf32> -> vector<20x128xf32>
    %c0_3 = arith.constant 0 : index
    %c0_4 = arith.constant 0 : index
    %3 = vector.load %arg6[%c0_3, %c0_4] : memref<102x1xf32, #tpu.memory_space<vmem>>, vector<20x1xf32>
    %4 = vector.broadcast %3 : vector<20x1xf32> to vector<20x128xf32>
    %5 = arith.addf %2, %4 : vector<20x128xf32>
    %cst_5 = arith.constant 0.000000e+00 : f32
    %6 = vector.broadcast %cst_5 : f32 to vector<20x128xf32>
    %7 = arith.maximumf %5, %6 : vector<20x128xf32>
    %c0_6 = arith.constant 0 : index
    %c0_7 = arith.constant 0 : index
    %8 = vector.load %arg3[%c0_6, %c0_7] : memref<10x20xf32, #tpu.memory_space<vmem>>, vector<10x20xf32>
    %cst_8 = arith.constant dense<0.000000e+00> : vector<10x128xf32>
    %9 = tpu.matmul %8, %7, %cst_8 {dimension_numbers = #tpu.dot_dimension_numbers<[1], [0], [0], [1], [0, 0, 1, 1], [], []>} : vector<10x20xf32>, vector<20x128xf32>, vector<10x128xf32> -> vector<10x128xf32>
    %c20 = arith.constant 20 : index
    %c0_9 = arith.constant 0 : index
    %10 = vector.load %arg6[%c20, %c0_9] : memref<102x1xf32, #tpu.memory_space<vmem>>, vector<10x1xf32>
    %11 = vector.broadcast %10 : vector<10x1xf32> to vector<10x128xf32>
    %12 = arith.addf %9, %11 : vector<10x128xf32>
    %cst_10 = arith.constant 0.000000e+00 : f32
    %13 = vector.broadcast %cst_10 : f32 to vector<10x128xf32>
    %14 = arith.maximumf %12, %13 : vector<10x128xf32>
    %c0_11 = arith.constant 0 : index
    %c0_12 = arith.constant 0 : index
    %15 = vector.load %arg4[%c0_11, %c0_12] : memref<20x10xf32, #tpu.memory_space<vmem>>, vector<20x10xf32>
    %cst_13 = arith.constant dense<0.000000e+00> : vector<20x128xf32>
    %16 = tpu.matmul %15, %14, %cst_13 {dimension_numbers = #tpu.dot_dimension_numbers<[1], [0], [0], [1], [0, 0, 1, 1], [], []>} : vector<20x10xf32>, vector<10x128xf32>, vector<20x128xf32> -> vector<20x128xf32>
    %c30 = arith.constant 30 : index
    %c0_14 = arith.constant 0 : index
    %17 = vector.load %arg6[%c30, %c0_14] : memref<102x1xf32, #tpu.memory_space<vmem>>, vector<20x1xf32>
    %18 = vector.broadcast %17 : vector<20x1xf32> to vector<20x128xf32>
    %19 = arith.addf %16, %18 : vector<20x128xf32>
    %cst_15 = arith.constant 0.000000e+00 : f32
    %20 = vector.broadcast %cst_15 : f32 to vector<20x128xf32>
    %21 = arith.maximumf %19, %20 : vector<20x128xf32>
    %c0_16 = arith.constant 0 : index
    %c0_17 = arith.constant 0 : index
    %22 = vector.load %arg5[%c0_16, %c0_17] : memref<52x20xf32, #tpu.memory_space<vmem>>, vector<52x20xf32>
    %cst_18 = arith.constant dense<0.000000e+00> : vector<52x128xf32>
    %23 = tpu.matmul %22, %21, %cst_18 {dimension_numbers = #tpu.dot_dimension_numbers<[1], [0], [0], [1], [0, 0, 1, 1], [], []>} : vector<52x20xf32>, vector<20x128xf32>, vector<52x128xf32> -> vector<52x128xf32>
    %c50 = arith.constant 50 : index
    %c0_19 = arith.constant 0 : index
    %24 = vector.load %arg6[%c50, %c0_19] : memref<102x1xf32, #tpu.memory_space<vmem>>, vector<52x1xf32>
    %25 = vector.broadcast %24 : vector<52x1xf32> to vector<52x128xf32>
    %26 = arith.addf %23, %25 : vector<52x128xf32>
    %27 = arith.negf %26 : vector<52x128xf32>
    %28 = math.exp %27 : vector<52x128xf32>
    %cst_20 = arith.constant 1.000000e+00 : f32
    %29 = vector.broadcast %cst_20 : f32 to vector<52x128xf32>
    %30 = arith.addf %29, %28 : vector<52x128xf32>
    %31 = arith.divf %29, %30 : vector<52x128xf32>
    %c0_21 = arith.constant 0 : index
    %c0_22 = arith.constant 0 : index
    %32 = vector.load %arg7[%c0_21, %c0_22] : memref<52x128xf32, #tpu.memory_space<vmem>>, vector<52x128xf32>
    tpu.vector_store %arg7[%c0_21, %c0_22], %31 {strides = array<i32>} : memref<52x128xf32, #tpu.memory_space<vmem>>, vector<52x128xf32>,
    return
  }
  func.func @transform_0(%arg0: i32) -> (i32, i32) {
    %c0_i32 = arith.constant 0 : i32
    %c0_i32_0 = arith.constant 0 : i32
    return %c0_i32, %arg0 : i32, i32
  }
  func.func @transform_1(%arg0: i32) -> (i32, i32) {
    %c0_i32 = arith.constant 0 : i32
    %c0_i32_0 = arith.constant 0 : i32
    %c0_i32_1 = arith.constant 0 : i32
    return %c0_i32, %c0_i32_0 : i32, i32
  }
  func.func @transform_2(%arg0: i32) -> (i32, i32) {
    %c0_i32 = arith.constant 0 : i32
    %c0_i32_0 = arith.constant 0 : i32
    %c0_i32_1 = arith.constant 0 : i32
    return %c0_i32, %c0_i32_0 : i32, i32
  }
  func.func @transform_3(%arg0: i32) -> (i32, i32) {
    %c0_i32 = arith.constant 0 : i32
    %c0_i32_0 = arith.constant 0 : i32
    %c0_i32_1 = arith.constant 0 : i32
    return %c0_i32, %c0_i32_0 : i32, i32
  }
  func.func @transform_4(%arg0: i32) -> (i32, i32) {
    %c0_i32 = arith.constant 0 : i32
    %c0_i32_0 = arith.constant 0 : i32
    %c0_i32_1 = arith.constant 0 : i32
    return %c0_i32, %c0_i32_0 : i32, i32
  }
  func.func @transform_5(%arg0: i32) -> (i32, i32) {
    %c0_i32 = arith.constant 0 : i32
    %c0_i32_0 = arith.constant 0 : i32
    %c0_i32_1 = arith.constant 0 : i32
    return %c0_i32, %c0_i32_0 : i32, i32
  }
  func.func @transform_6(%arg0: i32) -> (i32, i32) {
    %c0_i32 = arith.constant 0 : i32
    %c0_i32_0 = arith.constant 0 : i32
    return %c0_i32, %arg0 : i32, i32
  }
}

</mosaic_0001>

<llo_original>
// kernel: tpu_custom_call.1
$region0: #{tpu_custom_call.1}
  #allocation0 [shape = 'u32[]', space=smem, size = 0x4, offset = 0x4, fixed_abs, tag = 'smem constant byte address 0x4 - core index']
  #allocation1 [shape = 'u32[144,128]{1,0:T(1,128)}', space=vmem, size = 0x12000, scoped, tag = 'internal scratch']
  %s0 = inlined_call_operand.vmem [shape: f32[52,128], index: 0, kind: input, shape index: {}]
  %s1 = inlined_call_operand.vmem [shape: f32[20,52], index: 1, kind: input, shape index: {}]
  %s2 = inlined_call_operand.vmem [shape: f32[10,20], index: 2, kind: input, shape index: {}]
  %s3 = inlined_call_operand.vmem [shape: f32[20,10], index: 3, kind: input, shape index: {}]
  %s4 = inlined_call_operand.vmem [shape: f32[52,20], index: 4, kind: input, shape index: {}]
  %s5 = inlined_call_operand.vmem [shape: f32[102,1], index: 5, kind: input, shape index: {}]
  %s6 = inlined_call_operand.hbm [shape: f32[52,128], index: 6, kind: output, shape index: {}]
  %s7 = sld [smem:[#allocation0]]
  $region34: #{tpu_custom_call.1} parent=0
    _
  %s9 = ssub.s32 1, %s7
  %s10 = scalar_select 0, %s9, %s7
  $region1: #{tpu_custom_call.1} parent=0
    #allocation2 [shape = 'u8[28672]{0}', space=vmem, size = 0x7000, scoped, tag = 'output window, operand 0, single buffered']
    #allocation3 [shape = 's32[1]{0}', space=sflag, size = 0x4, scoped, tag = 'scoped memory for tpu_custom_call.1']
    %11 = vsyncpa [#allocation3], 0
    // Predicated region
    $region2: #{tpu_custom_call.1} parent=1 // pred_check
      _
    $region3: #{tpu_custom_call.1} parent=1 // pred_check_branch
      %13 = sbr.rel (0) target = $region5
    $region4: #{tpu_custom_call.1} parent=1 // pred_region
      _
    $region5: #{tpu_custom_call.1} parent=1 // pred_fallthru
      _
    // Predicated region
    $region6: #{tpu_custom_call.1} parent=1 // pred_check
      _
    $region7: #{tpu_custom_call.1} parent=1 // pred_check_branch
      %15 = sbr.rel (0) target = $region9
    $region8: #{tpu_custom_call.1} parent=1 // pred_region
      _
    $region9: #{tpu_custom_call.1} parent=1 // pred_fallthru
      _
    // Predicated region
    $region10: #{tpu_custom_call.1} parent=1 // pred_check
      _
    $region11: #{tpu_custom_call.1} parent=1 // pred_check_branch
      %17 = sbr.rel (0) target = $region13
    $region12: #{tpu_custom_call.1} parent=1 // pred_region
      _
    $region13: #{tpu_custom_call.1} parent=1 // pred_fallthru
      _
    // Predicated region
    $region14: #{tpu_custom_call.1} parent=1 // pred_check
      _
    $region15: #{tpu_custom_call.1} parent=1 // pred_check_branch
      %19 = sbr.rel (0) target = $region17
    $region16: #{tpu_custom_call.1} parent=1 // pred_region
      _
    $region17: #{tpu_custom_call.1} parent=1 // pred_fallthru
      _
    // Predicated region
    $region18: #{tpu_custom_call.1} parent=1 // pred_check
      _
    $region19: #{tpu_custom_call.1} parent=1 // pred_check_branch
      %21 = sbr.rel (0) target = $region21
    $region20: #{tpu_custom_call.1} parent=1 // pred_region
      _
    $region21: #{tpu_custom_call.1} parent=1 // pred_fallthru
      _
    // Predicated region
    $region22: #{tpu_custom_call.1} parent=1 // pred_check
      _
    $region23: #{tpu_custom_call.1} parent=1 // pred_check_branch
      %23 = sbr.rel (0) target = $region25
    $region24: #{tpu_custom_call.1} parent=1 // pred_region
      _
    $region25: #{tpu_custom_call.1} parent=1 // pred_fallthru
      _
    %v24 = vld [vmem:[%s0] sm:$0xff]
    %v25 = vld [vmem:[%s0 + $0x8] sm:$0xff]
    %v26 = vld [vmem:[%s0 + $0x10] sm:$0xff]
    %v27 = vld [vmem:[%s0 + $0x18] sm:$0xff]
    %v28 = vld [vmem:[%s0 + $0x20] sm:$0xff]
    %v29 = vld [vmem:[%s0 + $0x28] sm:$0xff]
    %v30 = vld [vmem:[%s0 + $0x30] sm:$0xf]
    %v31 = vld [vmem:[%s1] sm:$0xff]
    %v32 = vld [vmem:[%s1 + $0x8] sm:$0xff]
    %v33 = vld [vmem:[%s1 + $0x10] sm:$0xf]
    %v34 = vld [vmem:[%s5] sm:$0xff]
    %v35 = vld [vmem:[%s5 + $0x8] sm:$0xff]
    %v36 = vld [vmem:[%s5 + $0x10] sm:$0xf]
    %38 = vset.pattern.permute.xlu0 0
    %39 = vperm.xlu0 %38, %v34
    %v40 = vpop.permute.xlu0 %39
    %43 = vset.pattern.permute.xlu0 0
    %44 = vperm.xlu0 %43, %v35
    %v45 = vpop.permute.xlu0 %44
    %48 = vset.pattern.permute.xlu0 0
    %49 = vperm.xlu0 %48, %v36
    %v50 = vpop.permute.xlu0 %49
    %vm52 = vcmask 424960
    %v54 = vsel %vm52, %v31, 0
    %v57 = vsel %vm52, %v32, 0
    %v60 = vsel %vm52, %v33, 0
    %vm62 = vcmask 1043456
    %v64 = vsel %vm62, %v30, 0
    %66 = vmatprep.subr.mxu0 0.0
    %67 = vmatpush1.msra.mxu0 %v24
    %68 = vmatprep.subr.mxu0 0.0
    %69 = vmatpush1.msra.mxu0 %v25
    %70 = vmatprep.subr.mxu0 0.0
    %71 = vmatpush1.msra.mxu0 %v26
    %72 = vmatprep.subr.mxu0 0.0
    %73 = vmatpush1.msra.mxu0 %v27
    %74 = vmatprep.subr.mxu0 0.0
    %75 = vmatpush1.msra.mxu0 %v28
    %76 = vmatprep.subr.mxu0 0.0
    %77 = vmatpush1.msra.mxu0 %v29
    %78 = vmatprep.subr.mxu0 0.0
    %79 = vmatpush1.msra.mxu0 %v64
    %80 = vmatprep.subr.mxu0 0.0
    %81 = vmatpush1.msra.mxu0 0.0
    %82 = vmatprep.subr.mxu0 0.0
    %83 = vmatpush1.msra.mxu0 0.0
    %84 = vmatprep.subr.mxu0 0.0
    %85 = vmatpush1.msra.mxu0 0.0
    %86 = vmatprep.subr.mxu0 0.0
    %87 = vmatpush1.msra.mxu0 0.0
    %88 = vmatprep.subr.mxu0 0.0
    %89 = vmatpush1.msra.mxu0 0.0
    %90 = vmatprep.subr.mxu0 0.0
    %91 = vmatpush1.msra.mxu0 0.0
    %92 = vmatprep.subr.mxu0 0.0
    %93 = vmatpush1.msra.mxu0 0.0
    %94 = vmatprep.subr.mxu0 0.0
    %95 = vmatpush1.msra.mxu0 0.0
    %96 = vmatprep.subr.mxu0 0.0
    %97 = vmatpush1.msra.mxu0 0.0
    %98 = vmatprep.subr.mxu0 0.0
    %99 = vmatpush1.msra.mxu0 0.0
    %100 = vmatprep.subr.mxu0 0.0
    %101 = vmatpush1.msra.mxu0 0.0
    %102 = vmatprep.subr.mxu0 0.0
    %103 = vmatpush1.msra.mxu0 0.0
    %104 = vmatprep.subr.mxu0 0.0
    %105 = vmatpush1.msra.mxu0 0.0
    %106 = vmatprep.subr.mxu0 0.0
    %107 = vmatpush1.msra.mxu0 0.0
    %108 = vmatprep.subr.mxu0 0.0
    %109 = vmatpush1.msra.mxu0 0.0
    %110 = vmatprep.subr.mxu0 0.0
    %111 = vmatpush1.msra.mxu0 0.0
    %112 = vmatprep.subr.mxu0 0.0
    %113 = vmatpush1.msra.mxu0 0.0
    %114 = vmatprep.subr.mxu0 0.0
    %115 = vmatpush1.msra.mxu0 0.0
    %116 = vmatprep.subr.mxu0 0.0
    %117 = vmatpush1.msra.mxu0 0.0
    %118 = vmatprep.subr.mxu0 0.0
    %119 = vmatpush1.msra.mxu0 0.0
    %120 = vmatprep.subr.mxu0 0.0
    %121 = vmatpush1.msra.mxu0 0.0
    %122 = vmatprep.subr.mxu0 0.0
    %123 = vmatpush1.msra.mxu0 0.0
    %124 = vmatprep.subr.mxu0 0.0
    %125 = vmatpush1.msra.mxu0 0.0
    %126 = vmatprep.subr.mxu0 0.0
    %127 = vmatpush1.msra.mxu0 0.0
    %128 = vmatprep.subr.mxu0 0.0
    %129 = vmatpush1.msra.mxu0 0.0
    %130 = vmatprep.mubr.f32.mxu0 0.0
    %131 = vmatmul.mubr.f32.gmra.mrb[0].mxu0 %v54
    %v132 = vpop.f32.mrb[0].mxu0
    %v133 = vadd.f32 %v40, %v132
    %v134 = vpop.f32.mrb[0].mxu0
    %135 = vmatprep.mubr.f32.mxu0 0.0
    %136 = vmatmul.mubr.f32.gmra.mrb[0].mxu0 %v57
    %v137 = vpop.f32.mrb[0].mxu0
    %v138 = vadd.f32 %v45, %v137
    %v139 = vpop.f32.mrb[0].mxu0
    %140 = vmatprep.mubr.f32.mxu0 0.0
    %141 = vmatmul.mubr.f32.gmra.mrb[0].mxu0 %v60
    %v142 = vpop.f32.mrb[0].mxu0
    %v143 = vadd.f32 %v50, %v142
    %v144 = vpop.f32.mrb[0].mxu0
    %145 = vdwg.mxu0
    %v146 = vmax.f32 %v133, 0.0
    %v147 = vmax.f32 %v138, 0.0
    %v148 = vmax.f32 %v143, 0.0
    %v149 = vld [vmem:[%s2] sm:$0xff]
    %v150 = vld [vmem:[%s2 + $0x8] sm:$0x3]
    %v151 = vld [vmem:[%s5 + $0x14] sm:$0xff]
    %v152 = vld [vmem:[%s5 + $0x1c] sm:$0x3]
    %154 = vset.pattern.permute.xlu0 0
    %155 = vperm.xlu0 %154, %v151
    %v156 = vpop.permute.xlu0 %155
    %159 = vset.pattern.permute.xlu0 0
    %160 = vperm.xlu0 %159, %v152
    %v161 = vpop.permute.xlu0 %160
    %vm163 = vcmask 162816
    %v165 = vsel %vm163, %v149, 0
    %v168 = vsel %vm163, %v150, 0
    %v171 = vsel %vm62, %v148, 0
    %173 = vmatprep.subr.mxu0 0.0
    %174 = vmatpush1.msra.mxu0 %v146
    %175 = vmatprep.subr.mxu0 0.0
    %176 = vmatpush1.msra.mxu0 %v147
    %177 = vmatprep.subr.mxu0 0.0
    %178 = vmatpush1.msra.mxu0 %v171
    %179 = vmatprep.subr.mxu0 0.0
    %180 = vmatpush1.msra.mxu0 0.0
    %181 = vmatprep.subr.mxu0 0.0
    %182 = vmatpush1.msra.mxu0 0.0
    %183 = vmatprep.subr.mxu0 0.0
    %184 = vmatpush1.msra.mxu0 0.0
    %185 = vmatprep.subr.mxu0 0.0
    %186 = vmatpush1.msra.mxu0 0.0
    %187 = vmatprep.subr.mxu0 0.0
    %188 = vmatpush1.msra.mxu0 0.0
    %189 = vmatprep.subr.mxu0 0.0
    %190 = vmatpush1.msra.mxu0 0.0
    %191 = vmatprep.subr.mxu0 0.0
    %192 = vmatpush1.msra.mxu0 0.0
    %193 = vmatprep.subr.mxu0 0.0
    %194 = vmatpush1.msra.mxu0 0.0
    %195 = vmatprep.subr.mxu0 0.0
    %196 = vmatpush1.msra.mxu0 0.0
    %197 = vmatprep.subr.mxu0 0.0
    %198 = vmatpush1.msra.mxu0 0.0
    %199 = vmatprep.subr.mxu0 0.0
    %200 = vmatpush1.msra.mxu0 0.0
    %201 = vmatprep.subr.mxu0 0.0
    %202 = vmatpush1.msra.mxu0 0.0
    %203 = vmatprep.subr.mxu0 0.0
    %204 = vmatpush1.msra.mxu0 0.0
    %205 = vmatprep.subr.mxu0 0.0
    %206 = vmatpush1.msra.mxu0 0.0
    %207 = vmatprep.subr.mxu0 0.0
    %208 = vmatpush1.msra.mxu0 0.0
    %209 = vmatprep.subr.mxu0 0.0
    %210 = vmatpush1.msra.mxu0 0.0
    %211 = vmatprep.subr.mxu0 0.0
    %212 = vmatpush1.msra.mxu0 0.0
    %213 = vmatprep.subr.mxu0 0.0
    %214 = vmatpush1.msra.mxu0 0.0
    %215 = vmatprep.subr.mxu0 0.0
    %216 = vmatpush1.msra.mxu0 0.0
    %217 = vmatprep.subr.mxu0 0.0
    %218 = vmatpush1.msra.mxu0 0.0
    %219 = vmatprep.subr.mxu0 0.0
    %220 = vmatpush1.msra.mxu0 0.0
    %221 = vmatprep.subr.mxu0 0.0
    %222 = vmatpush1.msra.mxu0 0.0
    %223 = vmatprep.subr.mxu0 0.0
    %224 = vmatpush1.msra.mxu0 0.0
    %225 = vmatprep.subr.mxu0 0.0
    %226 = vmatpush1.msra.mxu0 0.0
    %227 = vmatprep.subr.mxu0 0.0
    %228 = vmatpush1.msra.mxu0 0.0
    %229 = vmatprep.subr.mxu0 0.0
    %230 = vmatpush1.msra.mxu0 0.0
    %231 = vmatprep.subr.mxu0 0.0
    %232 = vmatpush1.msra.mxu0 0.0
    %233 = vmatprep.subr.mxu0 0.0
    %234 = vmatpush1.msra.mxu0 0.0
    %235 = vmatprep.subr.mxu0 0.0
    %236 = vmatpush1.msra.mxu0 0.0
    %237 = vmatprep.mubr.f32.mxu0 0.0
    %238 = vmatmul.mubr.f32.gmra.mrb[0].mxu0 %v165
    %v239 = vpop.f32.mrb[0].mxu0
    %v240 = vadd.f32 %v156, %v239
    %v241 = vpop.f32.mrb[0].mxu0
    %242 = vmatprep.mubr.f32.mxu0 0.0
    %243 = vmatmul.mubr.f32.gmra.mrb[0].mxu0 %v168
    %v244 = vpop.f32.mrb[0].mxu0
    %v245 = vadd.f32 %v161, %v244
    %v246 = vpop.f32.mrb[0].mxu0
    %247 = vdwg.mxu0
    %v248 = vmax.f32 %v240, 0.0
    %v249 = vmax.f32 %v245, 0.0
    %v250 = vld [vmem:[%s3] sm:$0xff]
    %v251 = vld [vmem:[%s3 + $0x8] sm:$0xff]
    %v252 = vld [vmem:[%s3 + $0x10] sm:$0xf]
    %v253 = vld [vmem:[%s5 + $0x1e] sm:$0xff]
    %v254 = vld [vmem:[%s5 + $0x26] sm:$0xff]
    %v255 = vld [vmem:[%s5 + $0x2e] sm:$0xf]
    %257 = vset.pattern.permute.xlu0 0
    %258 = vperm.xlu0 %257, %v253
    %v259 = vpop.permute.xlu0 %258
    %262 = vset.pattern.permute.xlu0 0
    %263 = vperm.xlu0 %262, %v254
    %v264 = vpop.permute.xlu0 %263
    %267 = vset.pattern.permute.xlu0 0
    %268 = vperm.xlu0 %267, %v255
    %v269 = vpop.permute.xlu0 %268
    %vm271 = vcmask 80896
    %v273 = vsel %vm271, %v250, 0
    %v276 = vsel %vm271, %v251, 0
    %v279 = vsel %vm271, %v252, 0
    %vm281 = vcmask 1041408
    %v283 = vsel %vm281, %v249, 0
    %285 = vmatprep.subr.mxu0 0.0
    %286 = vmatpush1.msra.mxu0 %v248
    %287 = vmatprep.subr.mxu0 0.0
    %288 = vmatpush1.msra.mxu0 %v283
    %289 = vmatprep.subr.mxu0 0.0
    %290 = vmatpush1.msra.mxu0 0.0
    %291 = vmatprep.subr.mxu0 0.0
    %292 = vmatpush1.msra.mxu0 0.0
    %293 = vmatprep.subr.mxu0 0.0
    %294 = vmatpush1.msra.mxu0 0.0
    %295 = vmatprep.subr.mxu0 0.0
    %296 = vmatpush1.msra.mxu0 0.0
    %297 = vmatprep.subr.mxu0 0.0
    %298 = vmatpush1.msra.mxu0 0.0
    %299 = vmatprep.subr.mxu0 0.0
    %300 = vmatpush1.msra.mxu0 0.0
    %301 = vmatprep.subr.mxu0 0.0
    %302 = vmatpush1.msra.mxu0 0.0
    %303 = vmatprep.subr.mxu0 0.0
    %304 = vmatpush1.msra.mxu0 0.0
    %305 = vmatprep.subr.mxu0 0.0
    %306 = vmatpush1.msra.mxu0 0.0
    %307 = vmatprep.subr.mxu0 0.0
    %308 = vmatpush1.msra.mxu0 0.0
    %309 = vmatprep.subr.mxu0 0.0
    %310 = vmatpush1.msra.mxu0 0.0
    %311 = vmatprep.subr.mxu0 0.0
    %312 = vmatpush1.msra.mxu0 0.0
    %313 = vmatprep.subr.mxu0 0.0
    %314 = vmatpush1.msra.mxu0 0.0
    %315 = vmatprep.subr.mxu0 0.0
    %316 = vmatpush1.msra.mxu0 0.0
    %317 = vmatprep.subr.mxu0 0.0
    %318 = vmatpush1.msra.mxu0 0.0
    %319 = vmatprep.subr.mxu0 0.0
    %320 = vmatpush1.msra.mxu0 0.0
    %321 = vmatprep.subr.mxu0 0.0
    %322 = vmatpush1.msra.mxu0 0.0
    %323 = vmatprep.subr.mxu0 0.0
    %324 = vmatpush1.msra.mxu0 0.0
    %325 = vmatprep.subr.mxu0 0.0
    %326 = vmatpush1.msra.mxu0 0.0
    %327 = vmatprep.subr.mxu0 0.0
    %328 = vmatpush1.msra.mxu0 0.0
    %329 = vmatprep.subr.mxu0 0.0
    %330 = vmatpush1.msra.mxu0 0.0
    %331 = vmatprep.subr.mxu0 0.0
    %332 = vmatpush1.msra.mxu0 0.0
    %333 = vmatprep.subr.mxu0 0.0
    %334 = vmatpush1.msra.mxu0 0.0
    %335 = vmatprep.subr.mxu0 0.0
    %336 = vmatpush1.msra.mxu0 0.0
    %337 = vmatprep.subr.mxu0 0.0
    %338 = vmatpush1.msra.mxu0 0.0
    %339 = vmatprep.subr.mxu0 0.0
    %340 = vmatpush1.msra.mxu0 0.0
    %341 = vmatprep.subr.mxu0 0.0
    %342 = vmatpush1.msra.mxu0 0.0
    %343 = vmatprep.subr.mxu0 0.0
    %344 = vmatpush1.msra.mxu0 0.0
    %345 = vmatprep.subr.mxu0 0.0
    %346 = vmatpush1.msra.mxu0 0.0
    %347 = vmatprep.subr.mxu0 0.0
    %348 = vmatpush1.msra.mxu0 0.0
    %349 = vmatprep.mubr.f32.mxu0 0.0
    %350 = vmatmul.mubr.f32.gmra.mrb[0].mxu0 %v273
    %v351 = vpop.f32.mrb[0].mxu0
    %v352 = vadd.f32 %v259, %v351
    %v353 = vpop.f32.mrb[0].mxu0
    %354 = vmatprep.mubr.f32.mxu0 0.0
    %355 = vmatmul.mubr.f32.gmra.mrb[0].mxu0 %v276
    %v356 = vpop.f32.mrb[0].mxu0
    %v357 = vadd.f32 %v264, %v356
    %v358 = vpop.f32.mrb[0].mxu0
    %359 = vmatprep.mubr.f32.mxu0 0.0
    %360 = vmatmul.mubr.f32.gmra.mrb[0].mxu0 %v279
    %v361 = vpop.f32.mrb[0].mxu0
    %v362 = vadd.f32 %v269, %v361
    %v363 = vpop.f32.mrb[0].mxu0
    %364 = vdwg.mxu0
    %v365 = vmax.f32 %v352, 0.0
    %v366 = vmax.f32 %v357, 0.0
    %v367 = vmax.f32 %v362, 0.0
    %v368 = vld [vmem:[%s4] sm:$0xff]
    %v369 = vld [vmem:[%s4 + $0x8] sm:$0xff]
    %v370 = vld [vmem:[%s4 + $0x10] sm:$0xff]
    %v371 = vld [vmem:[%s4 + $0x18] sm:$0xff]
    %v372 = vld [vmem:[%s4 + $0x20] sm:$0xff]
    %v373 = vld [vmem:[%s4 + $0x28] sm:$0xff]
    %v374 = vld [vmem:[%s4 + $0x30] sm:$0xf]
    %v375 = vld [vmem:[%s5 + $0x32] sm:$0xff]
    %v376 = vld [vmem:[%s5 + $0x3a] sm:$0xff]
    %v377 = vld [vmem:[%s5 + $0x42] sm:$0xff]
    %v378 = vld [vmem:[%s5 + $0x4a] sm:$0xff]
    %v379 = vld [vmem:[%s5 + $0x52] sm:$0xff]
    %v380 = vld [vmem:[%s5 + $0x5a] sm:$0xff]
    %v381 = vld [vmem:[%s5 + $0x62] sm:$0xf]
    %383 = vset.pattern.permute.xlu0 0
    %384 = vperm.xlu0 %383, %v375
    %v385 = vpop.permute.xlu0 %384
    %388 = vset.pattern.permute.xlu0 0
    %389 = vperm.xlu0 %388, %v376
    %v390 = vpop.permute.xlu0 %389
    %393 = vset.pattern.permute.xlu0 0
    %394 = vperm.xlu0 %393, %v377
    %v395 = vpop.permute.xlu0 %394
    %398 = vset.pattern.permute.xlu0 0
    %399 = vperm.xlu0 %398, %v378
    %v400 = vpop.permute.xlu0 %399
    %403 = vset.pattern.permute.xlu0 0
    %404 = vperm.xlu0 %403, %v379
    %v405 = vpop.permute.xlu0 %404
    %408 = vset.pattern.permute.xlu0 0
    %409 = vperm.xlu0 %408, %v380
    %v410 = vpop.permute.xlu0 %409
    %413 = vset.pattern.permute.xlu0 0
    %414 = vperm.xlu0 %413, %v381
    %v415 = vpop.permute.xlu0 %414
    %v418 = vsel %vm163, %v368, 0
    %v421 = vsel %vm163, %v369, 0
    %v424 = vsel %vm163, %v370, 0
    %v427 = vsel %vm163, %v371, 0
    %v430 = vsel %vm163, %v372, 0
    %v433 = vsel %vm163, %v373, 0
    %v436 = vsel %vm163, %v374, 0
    %v439 = vsel %vm62, %v367, 0
    %441 = vmatprep.subr.mxu0 0.0
    %442 = vmatpush1.msra.mxu0 %v365
    %443 = vmatprep.subr.mxu0 0.0
    %444 = vmatpush1.msra.mxu0 %v366
    %445 = vmatprep.subr.mxu0 0.0
    %446 = vmatpush1.msra.mxu0 %v439
    %447 = vmatprep.subr.mxu0 0.0
    %448 = vmatpush1.msra.mxu0 0.0
    %449 = vmatprep.subr.mxu0 0.0
    %450 = vmatpush1.msra.mxu0 0.0
    %451 = vmatprep.subr.mxu0 0.0
    %452 = vmatpush1.msra.mxu0 0.0
    %453 = vmatprep.subr.mxu0 0.0
    %454 = vmatpush1.msra.mxu0 0.0
    %455 = vmatprep.subr.mxu0 0.0
    %456 = vmatpush1.msra.mxu0 0.0
    %457 = vmatprep.subr.mxu0 0.0
    %458 = vmatpush1.msra.mxu0 0.0
    %459 = vmatprep.subr.mxu0 0.0
    %460 = vmatpush1.msra.mxu0 0.0
    %461 = vmatprep.subr.mxu0 0.0
    %462 = vmatpush1.msra.mxu0 0.0
    %463 = vmatprep.subr.mxu0 0.0
    %464 = vmatpush1.msra.mxu0 0.0
    %465 = vmatprep.subr.mxu0 0.0
    %466 = vmatpush1.msra.mxu0 0.0
    %467 = vmatprep.subr.mxu0 0.0
    %468 = vmatpush1.msra.mxu0 0.0
    %469 = vmatprep.subr.mxu0 0.0
    %470 = vmatpush1.msra.mxu0 0.0
    %471 = vmatprep.subr.mxu0 0.0
    %472 = vmatpush1.msra.mxu0 0.0
    %473 = vmatprep.subr.mxu0 0.0
    %474 = vmatpush1.msra.mxu0 0.0
    %475 = vmatprep.subr.mxu0 0.0
    %476 = vmatpush1.msra.mxu0 0.0
    %477 = vmatprep.subr.mxu0 0.0
    %478 = vmatpush1.msra.mxu0 0.0
    %479 = vmatprep.subr.mxu0 0.0
    %480 = vmatpush1.msra.mxu0 0.0
    %481 = vmatprep.subr.mxu0 0.0
    %482 = vmatpush1.msra.mxu0 0.0
    %483 = vmatprep.subr.mxu0 0.0
    %484 = vmatpush1.msra.mxu0 0.0
    %485 = vmatprep.subr.mxu0 0.0
    %486 = vmatpush1.msra.mxu0 0.0
    %487 = vmatprep.subr.mxu0 0.0
    %488 = vmatpush1.msra.mxu0 0.0
    %489 = vmatprep.subr.mxu0 0.0
    %490 = vmatpush1.msra.mxu0 0.0
    %491 = vmatprep.subr.mxu0 0.0
    %492 = vmatpush1.msra.mxu0 0.0
    %493 = vmatprep.subr.mxu0 0.0
    %494 = vmatpush1.msra.mxu0 0.0
    %495 = vmatprep.subr.mxu0 0.0
    %496 = vmatpush1.msra.mxu0 0.0
    %497 = vmatprep.subr.mxu0 0.0
    %498 = vmatpush1.msra.mxu0 0.0
    %499 = vmatprep.subr.mxu0 0.0
    %500 = vmatpush1.msra.mxu0 0.0
    %501 = vmatprep.subr.mxu0 0.0
    %502 = vmatpush1.msra.mxu0 0.0
    %503 = vmatprep.subr.mxu0 0.0
    %504 = vmatpush1.msra.mxu0 0.0
    %505 = vmatprep.mubr.f32.mxu0 0.0
    %506 = vmatmul.mubr.f32.gmra.mrb[0].mxu0 %v418
    %v507 = vpop.f32.mrb[0].mxu0
    %v508 = vadd.f32 %v385, %v507
    %v509 = vpop.f32.mrb[0].mxu0
    %510 = vmatprep.mubr.f32.mxu0 0.0
    %511 = vmatmul.mubr.f32.gmra.mrb[0].mxu0 %v421
    %v512 = vpop.f32.mrb[0].mxu0
    %v513 = vadd.f32 %v390, %v512
    %v514 = vpop.f32.mrb[0].mxu0
    %515 = vmatprep.mubr.f32.mxu0 0.0
    %516 = vmatmul.mubr.f32.gmra.mrb[0].mxu0 %v424
    %v517 = vpop.f32.mrb[0].mxu0
    %v518 = vadd.f32 %v395, %v517
    %v519 = vpop.f32.mrb[0].mxu0
    %520 = vmatprep.mubr.f32.mxu0 0.0
    %521 = vmatmul.mubr.f32.gmra.mrb[0].mxu0 %v427
    %v522 = vpop.f32.mrb[0].mxu0
    %v523 = vadd.f32 %v400, %v522
    %v524 = vpop.f32.mrb[0].mxu0
    %525 = vmatprep.mubr.f32.mxu0 0.0
    %526 = vmatmul.mubr.f32.gmra.mrb[0].mxu0 %v430
    %v527 = vpop.f32.mrb[0].mxu0
    %v528 = vadd.f32 %v405, %v527
    %v529 = vpop.f32.mrb[0].mxu0
    %530 = vmatprep.mubr.f32.mxu0 0.0
    %531 = vmatmul.mubr.f32.gmra.mrb[0].mxu0 %v433
    %v532 = vpop.f32.mrb[0].mxu0
    %v533 = vadd.f32 %v410, %v532
    %v534 = vpop.f32.mrb[0].mxu0
    %535 = vmatprep.mubr.f32.mxu0 0.0
    %536 = vmatmul.mubr.f32.gmra.mrb[0].mxu0 %v436
    %v537 = vpop.f32.mrb[0].mxu0
    %v538 = vadd.f32 %v415, %v537
    %v539 = vpop.f32.mrb[0].mxu0
    %540 = vdwg.mxu0
    %v541 = vxor.u32 %v508, 2147483648
    %v542 = vxor.u32 %v513, 2147483648
    %v543 = vxor.u32 %v518, 2147483648
    %v544 = vxor.u32 %v523, 2147483648
    %v545 = vxor.u32 %v528, 2147483648
    %v546 = vxor.u32 %v533, 2147483648
    %v547 = vxor.u32 %v538, 2147483648
    %v548 = vmul.f32 %v541, 1.442695
    %v549 = vpow.pop %v548
    %v550 = vmul.f32 %v542, 1.442695
    %v551 = vpow.pop %v550
    %v552 = vmul.f32 %v543, 1.442695
    %v553 = vpow.pop %v552
    %v554 = vmul.f32 %v544, 1.442695
    %v555 = vpow.pop %v554
    %v556 = vmul.f32 %v545, 1.442695
    %v557 = vpow.pop %v556
    %v558 = vmul.f32 %v546, 1.442695
    %v559 = vpow.pop %v558
    %v560 = vmul.f32 %v547, 1.442695
    %v561 = vpow.pop %v560
    %v562 = vadd.f32 %v549, 1.0
    %v563 = vadd.f32 %v551, 1.0
    %v564 = vadd.f32 %v553, 1.0
    %v565 = vadd.f32 %v555, 1.0
    %v566 = vadd.f32 %v557, 1.0
    %v567 = vadd.f32 %v559, 1.0
    %v568 = vadd.f32 %v561, 1.0
    %v569 = vrcp.pop %v562
    %v570 = vmul.f32 1.0, %v569
    %v571 = vrcp.pop %v563
    %v572 = vmul.f32 1.0, %v571
    %v573 = vrcp.pop %v564
    %v574 = vmul.f32 1.0, %v573
    %v575 = vrcp.pop %v565
    %v576 = vmul.f32 1.0, %v575
    %v577 = vrcp.pop %v566
    %v578 = vmul.f32 1.0, %v577
    %v579 = vrcp.pop %v567
    %v580 = vmul.f32 1.0, %v579
    %v581 = vrcp.pop %v568
    %v582 = vmul.f32 1.0, %v581
    %583 = vst [vmem:[#allocation2] sm:$0xff] %v570
    %584 = vst [vmem:[#allocation2 + $0x8] sm:$0xff] %v572
    %585 = vst [vmem:[#allocation2 + $0x10] sm:$0xff] %v574
    %586 = vst [vmem:[#allocation2 + $0x18] sm:$0xff] %v576
    %587 = vst [vmem:[#allocation2 + $0x20] sm:$0xff] %v578
    %588 = vst [vmem:[#allocation2 + $0x28] sm:$0xff] %v580
    %589 = vst [vmem:[#allocation2 + $0x30] sm:$0xf] %v582
    // Predicated region
    $region26: #{tpu_custom_call.1} parent=1 // pred_check
      _
    $region27: #{tpu_custom_call.1} parent=1 // pred_check_branch
      %591 = sbr.rel (0) target = $region29
    $region28: #{tpu_custom_call.1} parent=1 // pred_region
      %s593 = ssub.s32 896, 896
      %594 = vsyncadd [#allocation3], %s593
      %s595 = sshll.u32 [#allocation2], 4
      %s596 = int_to_ptr.vmem [resolvable:$true] %s595
      %601 = dma.vmem_to_hbm [thread:$0]  %s596, 896, %s6, [#allocation3], 128, 128, 8
    $region29: #{tpu_custom_call.1} parent=1 // pred_fallthru
      _
    // Predicated region
    $region30: #{tpu_custom_call.1} parent=1 // pred_check
      _
    $region31: #{tpu_custom_call.1} parent=1 // pred_check_branch
      %603 = sbr.rel (0) target = $region33
    $region32: #{tpu_custom_call.1} parent=1 // pred_region
      %604 = dma.done [#allocation3], 896
    $region33: #{tpu_custom_call.1} parent=1 // pred_fallthru
      _
    %605 = vsyncpa [#allocation3], 1

</llo_original>
